<compile_context>
chip_gen: v6e
topology: v6e:2x2x1
jax: 0.10.0
libtpu: 0.0.40
codegen_flags: <defaults>
</compile_context>

<pallas_src>
import jax
import jax.numpy as jnp
from jax.experimental import pallas as pl
from jax.experimental.pallas import tpu as pltpu


def _h_swish_kernel(x_ref, o_ref):
    # Compute the gate in f32 (free relative to HBM bandwidth), store in the
    # output dtype. Matches ReLU6(x + 3) / 6 * x.
    x = x_ref[...].astype(jnp.float32)
    gate = jnp.clip(x + 3.0, 0.0, 6.0) / 6.0
    o_ref[...] = (x * gate).astype(o_ref.dtype)


def _launch(x2d, tr, *, vmem_limit_bytes=32 * 1024 * 1024):
    """Run the elementwise kernel over a (rows, lane) slab with tr rows/block."""
    rows, lane = x2d.shape
    grid = (pl.cdiv(rows, tr),)  # Pallas masks the ragged last block.
    return pl.pallas_call(
        _h_swish_kernel,
        out_shape=jax.ShapeDtypeStruct((rows, lane), x2d.dtype),
        grid_spec=pltpu.PrefetchScalarGridSpec(
            num_scalar_prefetch=0,
            grid=grid,
            in_specs=[pl.BlockSpec((tr, lane), lambda i: (i, 0))],
            out_specs=pl.BlockSpec((tr, lane), lambda i: (i, 0)),
        ),
        compiler_params=pltpu.CompilerParams(
            dimension_semantics=("parallel",),
            vmem_limit_bytes=vmem_limit_bytes,
        ),
    )(x2d)


def _h_swish_jnp(x):
    xf = x.astype(jnp.float32)
    return (xf * (jnp.clip(xf + 3.0, 0.0, 6.0) / 6.0)).astype(x.dtype)


def h_swish(x, *, block_bytes=4 * 1024 * 1024):
    """Elementwise hard-swish via Pallas. Accepts any shape / float dtype."""
    orig_shape = x.shape
    orig_dtype = x.dtype
    n = x.size
    if n == 0:
        return x
    itemsize = x.dtype.itemsize
    x_flat = x.reshape(-1)

    rem = n % 128
    if rem != 0:
        if n * itemsize <= block_bytes:
            # Whole (small) ragged array as one full-dim block: no pad, no
            # slice, zero extra HBM passes.
            out = _launch(x_flat.reshape(1, n), 1)
            return out.reshape(orig_shape)
        # Large ragged: kernel over the 128-aligned prefix, tiny (<128 elem)
        # tail in plain JAX, stitched with one concatenate.
        # TODO(synk): the concatenate is still one extra pass over the prefix;
        # a manual-DMA (pl.ANY) kernel could remove it if it ever matters.
        n_main = n - rem
        main = h_swish(x_flat[:n_main], block_bytes=block_bytes)
        tail = _h_swish_jnp(x_flat[n_main:])
        return jnp.concatenate([main, tail]).reshape(orig_shape)

    # ---- 128-aligned fast path (common NCHW case) ----
    # Widest lane width dividing n -> longer unmasked store runs.
    lane = 128
    for cand in (1024, 512, 256):
        if n % cand == 0:
            lane = cand
            break
    rows = n // lane

    # Native sublane packing: 8 rows f32, 16 bf16, 32 int8/fp8.
    sub = max(8, 32 // itemsize)
    # Keep blocks ~block_bytes regardless of dtype / lane width.
    tr_target = max(sub, block_bytes // (lane * itemsize))

    if rows <= sub:
        tr = rows  # single full-dim block (no alignment constraint applies)
    else:
        # At least 2 grid steps when possible so both v7x TensorCores drive HBM;
        # cap at the ~block_bytes tile for big inputs.
        half = pl.cdiv(rows, 2)
        half_aligned = ((half + sub - 1) // sub) * sub
        tr = min(tr_target, half_aligned, rows)

    out2d = _launch(x_flat.reshape(rows, lane), tr)
    return out2d.reshape(orig_shape)


def h_swish_ref(x):
    # f32-gated reference (matches PyTorch ReLU6(x+3)/6 * x semantics).
    xf = x.astype(jnp.float32)
    return (xf * (jnp.clip(xf + 3.0, 0.0, 6.0) / 6.0)).astype(x.dtype)


if __name__ == "__main__":
    key = jax.random.PRNGKey(0)

    # Small NCHW input consistent with typical usage of this activation.
    x = jax.random.normal(key, (2, 4, 16, 16), dtype=jnp.float32) * 4.0
    out = jax.block_until_ready(h_swish(x))
    ref = h_swish_ref(x)
    assert out.shape == x.shape and out.dtype == x.dtype
    assert jnp.allclose(out, ref, atol=1e-6, rtol=1e-6), "f32 mismatch vs reference"

    # Moderately sized aligned input (exercises the multi-block grid path).
    xm = jax.random.normal(jax.random.PRNGKey(3), (4, 64, 16, 16), dtype=jnp.float32) * 4.0
    outm = jax.block_until_ready(h_swish(xm))
    refm = h_swish_ref(xm)
    assert jnp.allclose(outm, refm, atol=1e-6, rtol=1e-6), "multi-block mismatch"

    # Small ragged size (single full-dim block path, no padding).
    k2 = jax.random.PRNGKey(1)
    x2 = jax.random.normal(k2, (3, 5, 7), dtype=jnp.float32) * 4.0
    out2 = jax.block_until_ready(h_swish(x2))
    ref2 = h_swish_ref(x2)
    assert out2.shape == x2.shape and out2.dtype == x2.dtype
    assert jnp.allclose(out2, ref2, atol=1e-6, rtol=1e-6), "ragged mismatch vs reference"

    # Large-ragged path (prefix kernel + tiny tail), forced via small block_bytes.
    x4 = jax.random.normal(jax.random.PRNGKey(4), (37, 131), dtype=jnp.float32) * 4.0
    out4 = jax.block_until_ready(h_swish(x4, block_bytes=4096))
    ref4 = h_swish_ref(x4)
    assert out4.shape == x4.shape and out4.dtype == x4.dtype
    assert jnp.allclose(out4, ref4, atol=1e-6, rtol=1e-6), "prefix+tail mismatch"

    # bf16 path (f32 gate, bf16 store).
    x3 = (jax.random.normal(jax.random.PRNGKey(2), (2, 4, 16, 16)) * 4.0).astype(jnp.bfloat16)
    out3 = jax.block_until_ready(h_swish(x3))
    ref3 = h_swish_ref(x3)
    assert out3.shape == x3.shape and out3.dtype == x3.dtype
    assert jnp.allclose(out3.astype(jnp.float32), ref3.astype(jnp.float32),
                        atol=1e-2, rtol=1e-2), "bf16 mismatch vs reference"

    print("KERNEL_OK")
</pallas_src>

<mosaic_0001>
module attributes {stable_mosaic.version = 11 : i64} {
  func.func @_h_swish_kernel(%arg0: i32, %arg1: memref<2x1024xf32, #tpu.memory_space<vmem>>, %arg2: memref<2x1024xf32, #tpu.memory_space<vmem>>) attributes {dimension_semantics = [#tpu.dimension_semantics<parallel>], iteration_bounds = array<i64: 1>, scalar_prefetch = 0 : i64, scratch_operands = 0 : i64, tpu.core_type = #tpu.core_type<tc>, window_params = [{transform_indices = @transform_0, window_bounds = array<i64: 2, 1024>}, {transform_indices = @transform_1, window_bounds = array<i64: 2, 1024>}]} {
    %c0 = arith.constant 0 : index
    %c0_0 = arith.constant 0 : index
    %0 = vector.load %arg1[%c0, %c0_0] : memref<2x1024xf32, #tpu.memory_space<vmem>>, vector<2x1024xf32>
    %cst = arith.constant 3.000000e+00 : f32
    %1 = vector.broadcast %cst : f32 to vector<2x1024xf32>
    %2 = arith.addf %0, %1 : vector<2x1024xf32>
    %cst_1 = arith.constant 0.000000e+00 : f32
    %cst_2 = arith.constant 6.000000e+00 : f32
    %3 = vector.broadcast %cst_1 : f32 to vector<2x1024xf32>
    %4 = arith.maximumf %3, %2 : vector<2x1024xf32>
    %5 = vector.broadcast %cst_2 : f32 to vector<2x1024xf32>
    %6 = arith.minimumf %5, %4 : vector<2x1024xf32>
    %cst_3 = arith.constant 6.000000e+00 : f32
    %7 = vector.broadcast %cst_3 : f32 to vector<2x1024xf32>
    %8 = arith.divf %6, %7 : vector<2x1024xf32>
    %9 = arith.mulf %0, %8 : vector<2x1024xf32>
    %c0_4 = arith.constant 0 : index
    %c0_5 = arith.constant 0 : index
    %10 = vector.load %arg2[%c0_4, %c0_5] : memref<2x1024xf32, #tpu.memory_space<vmem>>, vector<2x1024xf32>
    tpu.vector_store %arg2[%c0_4, %c0_5], %9 {strides = array<i32>} : memref<2x1024xf32, #tpu.memory_space<vmem>>, vector<2x1024xf32>,
    return
  }
  func.func @transform_0(%arg0: i32) -> (i32, i32) {
    %c0_i32 = arith.constant 0 : i32
    %c0_i32_0 = arith.constant 0 : i32
    return %arg0, %c0_i32 : i32, i32
  }
  func.func @transform_1(%arg0: i32) -> (i32, i32) {
    %c0_i32 = arith.constant 0 : i32
    %c0_i32_0 = arith.constant 0 : i32
    return %arg0, %c0_i32 : i32, i32
  }
}

</mosaic_0001>

<llo_original>
// kernel: tpu_custom_call.1
$region0: #{tpu_custom_call.1}
  #allocation0 [shape = 'u32[]', space=smem, size = 0x4, offset = 0x4, fixed_abs, tag = 'smem constant byte address 0x4 - core index']
  #allocation1 [shape = 'u32[144,128]{1,0:T(1,128)}', space=vmem, size = 0x12000, scoped, tag = 'internal scratch']
  %s0 = inlined_call_operand.hbm [shape: f32[2,1024], index: 0, kind: input, shape index: {}]
  %s1 = inlined_call_operand.hbm [shape: f32[2,1024], index: 1, kind: output, shape index: {}]
  %s2 = sld [smem:[#allocation0]]
  $region18: #{tpu_custom_call.1} parent=0
    _
  %s4 = ssub.s32 1, %s2
  %s5 = scalar_select 0, %s4, %s2
  $region1: #{tpu_custom_call.1} parent=0
    #allocation2 [shape = 'u8[8192]{0}', space=vmem, size = 0x2000, scoped, tag = 'input window, operand 0, single buffered']
    #allocation3 [shape = 's32[1]{0}', space=sflag, size = 0x4, scoped, tag = 'scoped memory for tpu_custom_call.1']
    #allocation4 [shape = 's32[1]{0}', space=sflag, size = 0x4, scoped, tag = 'scoped memory for tpu_custom_call.1']
    #allocation5 [shape = 'u8[8192]{0}', space=vmem, size = 0x2000, scoped, tag = 'output window, operand 0, single buffered']
    %6 = vsyncpa [#allocation3], 0
    %7 = vsyncpa [#allocation4], 0
    // Predicated region
    $region2: #{tpu_custom_call.1} parent=1 // pred_check
      _
    $region3: #{tpu_custom_call.1} parent=1 // pred_check_branch
      %9 = sbr.rel (0) target = $region5
    $region4: #{tpu_custom_call.1} parent=1 // pred_region
      %s11 = ssub.s32 256, 256
      %12 = vsyncadd [#allocation3], %s11
      %s14 = sshll.u32 [#allocation2], 4
      %s15 = int_to_ptr.vmem [resolvable:$true] %s14
      %17 = dma.hbm_to_vmem [thread:$0]  %s0, 256, %s15, [#allocation3]
    $region5: #{tpu_custom_call.1} parent=1 // pred_fallthru
      _
    // Predicated region
    $region6: #{tpu_custom_call.1} parent=1 // pred_check
      _
    $region7: #{tpu_custom_call.1} parent=1 // pred_check_branch
      %19 = sbr.rel (0) target = $region9
    $region8: #{tpu_custom_call.1} parent=1 // pred_region
      %20 = dma.done [#allocation3], 256
    $region9: #{tpu_custom_call.1} parent=1 // pred_fallthru
      _
    %v21 = vld [vmem:[#allocation2] sm:$0xff]
    %v22 = vld [vmem:[#allocation2 + $0x8] sm:$0xff]
    %v23 = vadd.f32 %v21, 3.0
    %v24 = vadd.f32 %v22, 3.0
    %v25 = vmax.f32 %v23, 0.0
    %v26 = vmax.f32 %v24, 0.0
    %v27 = vmin.f32 %v25, 6.0
    %v28 = vmin.f32 %v26, 6.0
    %v29 = vrcp.pop 6.0
    %v30 = vmul.f32 %v27, %v29
    %v31 = vmul.f32 %v28, %v29
    %v32 = vmul.f32 %v21, %v30
    %v33 = vmul.f32 %v22, %v31
    %34 = vst [vmem:[#allocation5] sm:$0xff] %v32
    %35 = vst [vmem:[#allocation5 + $0x8] sm:$0xff] %v33
    // Predicated region
    $region10: #{tpu_custom_call.1} parent=1 // pred_check
      _
    $region11: #{tpu_custom_call.1} parent=1 // pred_check_branch
      %37 = sbr.rel (0) target = $region13
    $region12: #{tpu_custom_call.1} parent=1 // pred_region
      %s39 = ssub.s32 256, 256
      %40 = vsyncadd [#allocation4], %s39
      %s42 = sshll.u32 [#allocation5], 4
      %s43 = int_to_ptr.vmem [resolvable:$true] %s42
      %45 = dma.vmem_to_hbm [thread:$0]  %s43, 256, %s1, [#allocation4]
    $region13: #{tpu_custom_call.1} parent=1 // pred_fallthru
      _
    // Predicated region
    $region14: #{tpu_custom_call.1} parent=1 // pred_check
      _
    $region15: #{tpu_custom_call.1} parent=1 // pred_check_branch
      %47 = sbr.rel (0) target = $region17
    $region16: #{tpu_custom_call.1} parent=1 // pred_region
      %48 = dma.done [#allocation4], 256
    $region17: #{tpu_custom_call.1} parent=1 // pred_fallthru
      _
    %49 = vsyncpa [#allocation3], 1
    %50 = vsyncpa [#allocation4], 1

</llo_original>
